<compile_context>
chip_gen: v6e
topology: v6e:2x2x1
jax: 0.10.0
libtpu: 0.0.40
codegen_flags: <defaults>
</compile_context>

<pallas_src>
import jax
import jax.numpy as jnp
from jax.experimental import pallas as pl
from jax.experimental.pallas import tpu as pltpu

# Problem sizes (small, consistent with the module's forward)
N, CIN, H, W = 2, 4, 16, 16
CINP = 8                      # CIN zero-padded to 8 so W*CINP = 128 lanes
CMID, COUT = 8, 8
EPS = 1e-5                    # nn.BatchNorm2d default eps
NH = N * H
INV_COUNT = 1.0 / float(N * H * W)


def conv_matrix(w, width):
    """PyTorch OIHW 3x3 weight -> banded matrix T of shape (3*W*Cin, W*Cout).

    With P[(n,y), dy*(W*Cin) + x'*Cin + ci] = x[n, y+dy-1, x', ci] (0 if OOB),
    P @ T equals Conv2d(x, w, padding=1) laid out as an (N*H, W*Cout) slab.
    Zero padding along W is encoded by the band structure of T.
    """
    cout, cin, kh, kw = w.shape
    cols = jnp.arange(width)
    # band[p, q, e] = 1  iff  input col p == output col q + (e - 1)
    band = ((cols[:, None, None] - cols[None, :, None] + 1)
            == jnp.arange(kw)[None, None, :]).astype(jnp.float32)
    t = jnp.einsum('pqe,oide->dpiqo', band, w.astype(jnp.float32))
    return t.reshape(kh * width * cin, width * cout)


def channel_pool(c, width):
    """(W*C, C) indicator: column c' sums the lanes x*C + c' over all x."""
    return jnp.tile(jnp.eye(c, dtype=jnp.float32), (width, 1))


def double_conv_kernel(x_ref, t1_ref, gb1_ref, t2_ref, gb2_ref,
                       pool_ref, poolt_ref, o_ref):
    # x_ref    : (N*H, W*CINP)       lane-dense input slab (rows are (n, y))
    # t*_ref   : (3*W*Cin, W*Cout)   banded conv-as-matmul weights
    # gb*_ref  : (2, C)              packed BN (gamma; beta)
    # pool_ref : (W*C, C)            channel pooling (shared, CMID == COUT)
    # poolt_ref: (C, W*C)            lane-tiling (pool transpose)
    # o_ref    : (N*H, W*COUT)       lane-dense output (128 lanes, unmasked)
    ri = jax.lax.broadcasted_iota(jnp.int32, (NH, 1), 0)
    y_id = ri % H
    first_row = y_id == 0
    last_row = y_id == (H - 1)

    def taps(a):
        # Build [row(y-1), row(y), row(y+1)] along lanes.  pltpu.roll shifts
        # whole image rows (sublane axis); the iota masks zero taps that fall
        # outside each image, which both implements zero padding in H and
        # stops bleed between batch images.  Each operand is 128 lanes, so
        # the concat lands exactly on vreg boundaries.
        up = jnp.where(first_row, 0.0, pltpu.roll(a, shift=1, axis=0))
        down = jnp.where(last_row, 0.0, pltpu.roll(a, shift=NH - 1, axis=0))
        return jnp.concatenate([up, a, down], axis=1)

    def bn_relu(h, gb, pool, pool_t):
        # Train-mode BatchNorm2d: biased stats over (N, H, W) in one pass
        # (sum & sum-of-squares), with the per-channel reduce / re-broadcast
        # fused into ONE (2,WC)@(WC,C) matmul and ONE (2,C)@(C,WC) matmul.
        stats = jnp.concatenate(
            [jnp.sum(h, axis=0, keepdims=True),
             jnp.sum(h * h, axis=0, keepdims=True)], axis=0)          # (2, W*C)
        s2 = jnp.dot(stats, pool, preferred_element_type=jnp.float32)  # (2, C)
        mean = s2[0:1] * INV_COUNT
        var = s2[1:2] * INV_COUNT - mean * mean
        scale = gb[0:1] * jax.lax.rsqrt(var + EPS)                     # (1, C)
        shift = gb[1:2] - mean * scale                                 # (1, C)
        ss = jnp.concatenate([scale, shift], axis=0)                   # (2, C)
        ssl = jnp.dot(ss, pool_t, preferred_element_type=jnp.float32)  # (2, W*C)
        return jnp.maximum(h * ssl[0:1] + ssl[1:2], 0.0)               # BN+ReLU

    x = x_ref[...]
    # ---- conv1 (single MXU matmul, K = 3*W*CINP = 384) + BN + ReLU ----
    h1 = jnp.dot(taps(x), t1_ref[...], preferred_element_type=jnp.float32)
    y1 = bn_relu(h1, gb1_ref[...], pool_ref[...], poolt_ref[...])
    # ---- conv2 (single MXU matmul, K = 3*W*CMID = 384) + BN + ReLU ----
    h2 = jnp.dot(taps(y1), t2_ref[...], preferred_element_type=jnp.float32)
    y2 = bn_relu(h2, gb2_ref[...], pool_ref[...], poolt_ref[...])
    o_ref[...] = y2


def make_double_conv_params(w1, b1, g1, be1, w2, b2, g2, be2):
    """Precompute constant kernel operands ONCE per weight update (hoisted out
    of the per-forward path).  b1 / b2 are accepted for nn.Conv2d API parity
    but dropped: a per-channel constant bias cancels exactly under train-mode
    (batch-stat) BatchNorm."""
    del b1, b2
    w1p = jnp.pad(w1.astype(jnp.float32),
                  ((0, 0), (0, CINP - CIN), (0, 0), (0, 0)))   # zero in-chans
    t1 = conv_matrix(w1p, W)                       # (3*W*CINP, W*CMID) = (384, 128)
    t2 = conv_matrix(w2.astype(jnp.float32), W)    # (3*W*CMID, W*COUT) = (384, 128)
    gb1 = jnp.stack([g1, be1]).astype(jnp.float32)  # (2, CMID)
    gb2 = jnp.stack([g2, be2]).astype(jnp.float32)  # (2, COUT)
    pool = channel_pool(COUT, W)                   # (W*C, C), shared CMID==COUT
    return t1, gb1, t2, gb2, pool, pool.T


@jax.jit
def double_conv(x_nchw, t1, gb1, t2, gb2, pool, pool_t):
    # NCHW -> lane-dense (N*H, W*CINP) slab with zero-padded channel lanes.
    # (At full-UNet scale the whole network should stay in this layout and
    #  skip the per-block transposes; negligible at this toy size.)
    x = jnp.transpose(x_nchw, (0, 2, 3, 1)).astype(jnp.float32)   # NHWC
    x = jnp.pad(x, ((0, 0), (0, 0), (0, 0), (0, CINP - CIN)))     # zero lanes
    x_slab = x.reshape(NH, W * CINP)                              # (32, 128)

    vmem = pl.BlockSpec(memory_space=pltpu.MemorySpace.VMEM)
    out_slab = pl.pallas_call(
        double_conv_kernel,
        out_shape=jax.ShapeDtypeStruct((NH, W * COUT), jnp.float32),
        in_specs=[vmem] * 7,
        out_specs=vmem,
    )(x_slab, t1, gb1, t2, gb2, pool, pool_t)

    out = out_slab.reshape(N, H, W, COUT)
    return jnp.transpose(out, (0, 3, 1, 2))        # back to NCHW


def ref_double_conv(x, w1, b1, g1, be1, w2, b2, g2, be2):
    """Pure-JAX reference mirroring PyTorch's DoubleConv.forward (train-mode BN).
    Keeps the conv biases to prove they cancel in the kernel."""
    def conv(x, w, b):
        y = jax.lax.conv_general_dilated(
            x, w, window_strides=(1, 1), padding='SAME',
            dimension_numbers=('NCHW', 'OIHW', 'NCHW'))
        return y + b[None, :, None, None]

    def bn_relu(x, g, be):
        m = jnp.mean(x, axis=(0, 2, 3), keepdims=True)
        v = jnp.mean((x - m) ** 2, axis=(0, 2, 3), keepdims=True)
        y = (x - m) * jax.lax.rsqrt(v + EPS)
        y = y * g[None, :, None, None] + be[None, :, None, None]
        return jnp.maximum(y, 0.0)

    y = bn_relu(conv(x, w1, b1), g1, be1)
    y = bn_relu(conv(y, w2, b2), g2, be2)
    return y


if __name__ == "__main__":
    key = jax.random.PRNGKey(0)
    kx, k1, k2, k3, k4 = jax.random.split(key, 5)

    x = jax.random.normal(kx, (N, CIN, H, W), jnp.float32)

    # Deterministic parameter init (shapes from nn.Conv2d / nn.BatchNorm2d).
    w1 = jax.random.normal(k1, (CMID, CIN, 3, 3), jnp.float32) * 0.1
    b1 = jax.random.normal(k2, (CMID,), jnp.float32) * 0.1
    w2 = jax.random.normal(k3, (COUT, CMID, 3, 3), jnp.float32) * 0.1
    b2 = jax.random.normal(k4, (COUT,), jnp.float32) * 0.1
    g1 = jnp.ones((CMID,), jnp.float32)    # BN weight default init
    be1 = jnp.zeros((CMID,), jnp.float32)  # BN bias default init
    g2 = jnp.ones((COUT,), jnp.float32)
    be2 = jnp.zeros((COUT,), jnp.float32)

    # Weight-dependent operands built ONCE (hoisted out of the forward path).
    params = make_double_conv_params(w1, b1, g1, be1, w2, b2, g2, be2)
    params = jax.tree_util.tree_map(jax.block_until_ready, params)

    out = double_conv(x, *params)
    out = jax.block_until_ready(out)

    ref = ref_double_conv(x, w1, b1, g1, be1, w2, b2, g2, be2)
    err = float(jnp.max(jnp.abs(out - ref)))
    assert out.shape == (N, COUT, H, W)
    assert err < 1e-3, f"mismatch vs reference: {err}"

    print("KERNEL_OK")
</pallas_src>

<mosaic_0001>
module attributes {stable_mosaic.version = 11 : i64} {
  func.func @double_conv_kernel(%arg0: memref<32x128xf32, #tpu.memory_space<vmem>>, %arg1: memref<384x128xf32, #tpu.memory_space<vmem>>, %arg2: memref<2x8xf32, #tpu.memory_space<vmem>>, %arg3: memref<384x128xf32, #tpu.memory_space<vmem>>, %arg4: memref<2x8xf32, #tpu.memory_space<vmem>>, %arg5: memref<128x8xf32, #tpu.memory_space<vmem>>, %arg6: memref<8x128xf32, #tpu.memory_space<vmem>>, %arg7: memref<32x128xf32, #tpu.memory_space<vmem>>) attributes {dimension_semantics = [], scalar_prefetch = 0 : i64, scratch_operands = 0 : i64, tpu.core_type = #tpu.core_type<tc>} {
    %0 = tpu.iota {dimensions = array<i32: 0>} : vector<32x1xi32>
    %c16_i32 = arith.constant 16 : i32
    %c0_i32 = arith.constant 0 : i32
    %1 = arith.cmpi eq, %c16_i32, %c0_i32 : i32
    %c1_i32 = arith.constant 1 : i32
    %2 = arith.select %1, %c1_i32, %c16_i32 : i32
    %3 = vector.broadcast %2 : i32 to vector<32x1xi32>
    %4 = arith.remsi %0, %3 : vector<32x1xi32>
    %c0_i32_0 = arith.constant 0 : i32
    %5 = vector.broadcast %c0_i32_0 : i32 to vector<32x1xi32>
    %6 = arith.cmpi ne, %4, %5 : vector<32x1xi32>
    %c0_i32_1 = arith.constant 0 : i32
    %7 = vector.broadcast %c0_i32_1 : i32 to vector<32x1xi32>
    %8 = arith.cmpi slt, %4, %7 : vector<32x1xi32>
    %c0_i32_2 = arith.constant 0 : i32
    %9 = arith.cmpi slt, %2, %c0_i32_2 : i32
    %10 = vector.broadcast %9 : i1 to vector<32x1xi1>
    %11 = vector.broadcast %10 : vector<32x1xi1> to vector<32x1xi1>
    %12 = arith.xori %8, %11 : vector<32x1xi1>
    %13 = arith.andi %12, %6 : vector<32x1xi1>
    %14 = vector.broadcast %2 : i32 to vector<32x1xi32>
    %15 = arith.addi %4, %14 : vector<32x1xi32>
    %16 = arith.select %13, %15, %4 : vector<32x1xi1>, vector<32x1xi32>
    %c0_i32_3 = arith.constant 0 : i32
    %17 = vector.broadcast %c0_i32_3 : i32 to vector<32x1xi32>
    %18 = arith.cmpi eq, %16, %17 : vector<32x1xi32>
    %c15_i32 = arith.constant 15 : i32
    %19 = vector.broadcast %c15_i32 : i32 to vector<32x1xi32>
    %20 = arith.cmpi eq, %16, %19 : vector<32x1xi32>
    %c0 = arith.constant 0 : index
    %c0_4 = arith.constant 0 : index
    %21 = vector.load %arg0[%c0, %c0_4] : memref<32x128xf32, #tpu.memory_space<vmem>>, vector<32x128xf32>
    %c1_i32_5 = arith.constant 1 : i32
    %22 = tpu.dynamic_rotate %21 by %c1_i32_5 dim 0 : vector<32x128xf32>, i32 -> vector<32x128xf32>
    %cst = arith.constant 0.000000e+00 : f32
    %23 = vector.shape_cast %18 : vector<32x1xi1> to vector<32x1xi1>
    %24 = vector.broadcast %23 : vector<32x1xi1> to vector<32x128xi1>
    %25 = vector.broadcast %cst : f32 to vector<32x128xf32>
    %26 = arith.select %24, %25, %22 : vector<32x128xi1>, vector<32x128xf32>
    %c31_i32 = arith.constant 31 : i32
    %27 = tpu.dynamic_rotate %21 by %c31_i32 dim 0 : vector<32x128xf32>, i32 -> vector<32x128xf32>
    %cst_6 = arith.constant 0.000000e+00 : f32
    %28 = vector.shape_cast %20 : vector<32x1xi1> to vector<32x1xi1>
    %29 = vector.broadcast %28 : vector<32x1xi1> to vector<32x128xi1>
    %30 = vector.broadcast %cst_6 : f32 to vector<32x128xf32>
    %31 = arith.select %29, %30, %27 : vector<32x128xi1>, vector<32x128xf32>
    %32 = tpu.concatenate %26, %21, %31 in 1 : vector<32x128xf32>, vector<32x128xf32>, vector<32x128xf32> -> vector<32x384xf32>
    %c0_7 = arith.constant 0 : index
    %c0_8 = arith.constant 0 : index
    %33 = vector.load %arg1[%c0_7, %c0_8] : memref<384x128xf32, #tpu.memory_space<vmem>>, vector<384x128xf32>
    %cst_9 = arith.constant dense<0.000000e+00> : vector<32x128xf32>
    %34 = tpu.matmul %32, %33, %cst_9 {dimension_numbers = #tpu.dot_dimension_numbers<[1], [0], [0], [1], [0, 0, 1, 1], [], []>} : vector<32x384xf32>, vector<384x128xf32>, vector<32x128xf32> -> vector<32x128xf32>
    %c0_10 = arith.constant 0 : index
    %c0_11 = arith.constant 0 : index
    %35 = vector.load %arg2[%c0_10, %c0_11] : memref<2x8xf32, #tpu.memory_space<vmem>>, vector<2x8xf32>
    %c0_12 = arith.constant 0 : index
    %c0_13 = arith.constant 0 : index
    %36 = vector.load %arg5[%c0_12, %c0_13] : memref<128x8xf32, #tpu.memory_space<vmem>>, vector<128x8xf32>
    %c0_14 = arith.constant 0 : index
    %c0_15 = arith.constant 0 : index
    %37 = vector.load %arg6[%c0_14, %c0_15] : memref<8x128xf32, #tpu.memory_space<vmem>>, vector<8x128xf32>
    %cst_16 = arith.constant dense<0.000000e+00> : vector<128xf32>
    %38 = vector.multi_reduction <add>, %34, %cst_16 [0] : vector<32x128xf32> to vector<128xf32>
    %39 = vector.shape_cast %38 : vector<128xf32> to vector<1x128xf32>
    %40 = arith.mulf %34, %34 : vector<32x128xf32>
    %cst_17 = arith.constant dense<0.000000e+00> : vector<128xf32>
    %41 = vector.multi_reduction <add>, %40, %cst_17 [0] : vector<32x128xf32> to vector<128xf32>
    %42 = vector.shape_cast %41 : vector<128xf32> to vector<1x128xf32>
    %43 = tpu.concatenate %39, %42 in 0 : vector<1x128xf32>, vector<1x128xf32> -> vector<2x128xf32>
    %cst_18 = arith.constant dense<0.000000e+00> : vector<2x8xf32>
    %44 = tpu.matmul %43, %36, %cst_18 {dimension_numbers = #tpu.dot_dimension_numbers<[1], [0], [0], [1], [0, 0, 1, 1], [], []>} : vector<2x128xf32>, vector<128x8xf32>, vector<2x8xf32> -> vector<2x8xf32>
    %45 = vector.extract_strided_slice %44 {offsets = [0, 0], sizes = [1, 8], strides = [1, 1]} : vector<2x8xf32> to vector<1x8xf32>
    %cst_19 = arith.constant 0.001953125 : f32
    %46 = vector.broadcast %cst_19 : f32 to vector<1x8xf32>
    %47 = arith.mulf %45, %46 : vector<1x8xf32>
    %48 = vector.extract_strided_slice %44 {offsets = [1, 0], sizes = [1, 8], strides = [1, 1]} : vector<2x8xf32> to vector<1x8xf32>
    %cst_20 = arith.constant 0.001953125 : f32
    %49 = vector.broadcast %cst_20 : f32 to vector<1x8xf32>
    %50 = arith.mulf %48, %49 : vector<1x8xf32>
    %51 = arith.mulf %47, %47 : vector<1x8xf32>
    %52 = arith.subf %50, %51 : vector<1x8xf32>
    %53 = vector.extract_strided_slice %35 {offsets = [0, 0], sizes = [1, 8], strides = [1, 1]} : vector<2x8xf32> to vector<1x8xf32>
    %cst_21 = arith.constant 9.99999974E-6 : f32
    %54 = vector.broadcast %cst_21 : f32 to vector<1x8xf32>
    %55 = arith.addf %52, %54 : vector<1x8xf32>
    %56 = math.rsqrt %55 : vector<1x8xf32>
    %57 = arith.mulf %53, %56 : vector<1x8xf32>
    %58 = vector.extract_strided_slice %35 {offsets = [1, 0], sizes = [1, 8], strides = [1, 1]} : vector<2x8xf32> to vector<1x8xf32>
    %59 = arith.mulf %47, %57 : vector<1x8xf32>
    %60 = arith.subf %58, %59 : vector<1x8xf32>
    %61 = tpu.concatenate %57, %60 in 0 : vector<1x8xf32>, vector<1x8xf32> -> vector<2x8xf32>
    %cst_22 = arith.constant dense<0.000000e+00> : vector<2x128xf32>
    %62 = tpu.matmul %61, %37, %cst_22 {dimension_numbers = #tpu.dot_dimension_numbers<[1], [0], [0], [1], [0, 0, 1, 1], [], []>} : vector<2x8xf32>, vector<8x128xf32>, vector<2x128xf32> -> vector<2x128xf32>
    %63 = vector.extract_strided_slice %62 {offsets = [0, 0], sizes = [1, 128], strides = [1, 1]} : vector<2x128xf32> to vector<1x128xf32>
    %64 = vector.broadcast %63 : vector<1x128xf32> to vector<32x128xf32>
    %65 = arith.mulf %34, %64 : vector<32x128xf32>
    %66 = vector.extract_strided_slice %62 {offsets = [1, 0], sizes = [1, 128], strides = [1, 1]} : vector<2x128xf32> to vector<1x128xf32>
    %67 = vector.broadcast %66 : vector<1x128xf32> to vector<32x128xf32>
    %68 = arith.addf %65, %67 : vector<32x128xf32>
    %cst_23 = arith.constant 0.000000e+00 : f32
    %69 = vector.broadcast %cst_23 : f32 to vector<32x128xf32>
    %70 = arith.maximumf %68, %69 : vector<32x128xf32>
    %c1_i32_24 = arith.constant 1 : i32
    %71 = tpu.dynamic_rotate %70 by %c1_i32_24 dim 0 : vector<32x128xf32>, i32 -> vector<32x128xf32>
    %cst_25 = arith.constant 0.000000e+00 : f32
    %72 = vector.shape_cast %18 : vector<32x1xi1> to vector<32x1xi1>
    %73 = vector.broadcast %72 : vector<32x1xi1> to vector<32x128xi1>
    %74 = vector.broadcast %cst_25 : f32 to vector<32x128xf32>
    %75 = arith.select %73, %74, %71 : vector<32x128xi1>, vector<32x128xf32>
    %c31_i32_26 = arith.constant 31 : i32
    %76 = tpu.dynamic_rotate %70 by %c31_i32_26 dim 0 : vector<32x128xf32>, i32 -> vector<32x128xf32>
    %cst_27 = arith.constant 0.000000e+00 : f32
    %77 = vector.shape_cast %20 : vector<32x1xi1> to vector<32x1xi1>
    %78 = vector.broadcast %77 : vector<32x1xi1> to vector<32x128xi1>
    %79 = vector.broadcast %cst_27 : f32 to vector<32x128xf32>
    %80 = arith.select %78, %79, %76 : vector<32x128xi1>, vector<32x128xf32>
    %81 = tpu.concatenate %75, %70, %80 in 1 : vector<32x128xf32>, vector<32x128xf32>, vector<32x128xf32> -> vector<32x384xf32>
    %c0_28 = arith.constant 0 : index
    %c0_29 = arith.constant 0 : index
    %82 = vector.load %arg3[%c0_28, %c0_29] : memref<384x128xf32, #tpu.memory_space<vmem>>, vector<384x128xf32>
    %cst_30 = arith.constant dense<0.000000e+00> : vector<32x128xf32>
    %83 = tpu.matmul %81, %82, %cst_30 {dimension_numbers = #tpu.dot_dimension_numbers<[1], [0], [0], [1], [0, 0, 1, 1], [], []>} : vector<32x384xf32>, vector<384x128xf32>, vector<32x128xf32> -> vector<32x128xf32>
    %c0_31 = arith.constant 0 : index
    %c0_32 = arith.constant 0 : index
    %84 = vector.load %arg4[%c0_31, %c0_32] : memref<2x8xf32, #tpu.memory_space<vmem>>, vector<2x8xf32>
    %c0_33 = arith.constant 0 : index
    %c0_34 = arith.constant 0 : index
    %85 = vector.load %arg5[%c0_33, %c0_34] : memref<128x8xf32, #tpu.memory_space<vmem>>, vector<128x8xf32>
    %c0_35 = arith.constant 0 : index
    %c0_36 = arith.constant 0 : index
    %86 = vector.load %arg6[%c0_35, %c0_36] : memref<8x128xf32, #tpu.memory_space<vmem>>, vector<8x128xf32>
    %cst_37 = arith.constant dense<0.000000e+00> : vector<128xf32>
    %87 = vector.multi_reduction <add>, %83, %cst_37 [0] : vector<32x128xf32> to vector<128xf32>
    %88 = vector.shape_cast %87 : vector<128xf32> to vector<1x128xf32>
    %89 = arith.mulf %83, %83 : vector<32x128xf32>
    %cst_38 = arith.constant dense<0.000000e+00> : vector<128xf32>
    %90 = vector.multi_reduction <add>, %89, %cst_38 [0] : vector<32x128xf32> to vector<128xf32>
    %91 = vector.shape_cast %90 : vector<128xf32> to vector<1x128xf32>
    %92 = tpu.concatenate %88, %91 in 0 : vector<1x128xf32>, vector<1x128xf32> -> vector<2x128xf32>
    %cst_39 = arith.constant dense<0.000000e+00> : vector<2x8xf32>
    %93 = tpu.matmul %92, %85, %cst_39 {dimension_numbers = #tpu.dot_dimension_numbers<[1], [0], [0], [1], [0, 0, 1, 1], [], []>} : vector<2x128xf32>, vector<128x8xf32>, vector<2x8xf32> -> vector<2x8xf32>
    %94 = vector.extract_strided_slice %93 {offsets = [0, 0], sizes = [1, 8], strides = [1, 1]} : vector<2x8xf32> to vector<1x8xf32>
    %cst_40 = arith.constant 0.001953125 : f32
    %95 = vector.broadcast %cst_40 : f32 to vector<1x8xf32>
    %96 = arith.mulf %94, %95 : vector<1x8xf32>
    %97 = vector.extract_strided_slice %93 {offsets = [1, 0], sizes = [1, 8], strides = [1, 1]} : vector<2x8xf32> to vector<1x8xf32>
    %cst_41 = arith.constant 0.001953125 : f32
    %98 = vector.broadcast %cst_41 : f32 to vector<1x8xf32>
    %99 = arith.mulf %97, %98 : vector<1x8xf32>
    %100 = arith.mulf %96, %96 : vector<1x8xf32>
    %101 = arith.subf %99, %100 : vector<1x8xf32>
    %102 = vector.extract_strided_slice %84 {offsets = [0, 0], sizes = [1, 8], strides = [1, 1]} : vector<2x8xf32> to vector<1x8xf32>
    %cst_42 = arith.constant 9.99999974E-6 : f32
    %103 = vector.broadcast %cst_42 : f32 to vector<1x8xf32>
    %104 = arith.addf %101, %103 : vector<1x8xf32>
    %105 = math.rsqrt %104 : vector<1x8xf32>
    %106 = arith.mulf %102, %105 : vector<1x8xf32>
    %107 = vector.extract_strided_slice %84 {offsets = [1, 0], sizes = [1, 8], strides = [1, 1]} : vector<2x8xf32> to vector<1x8xf32>
    %108 = arith.mulf %96, %106 : vector<1x8xf32>
    %109 = arith.subf %107, %108 : vector<1x8xf32>
    %110 = tpu.concatenate %106, %109 in 0 : vector<1x8xf32>, vector<1x8xf32> -> vector<2x8xf32>
    %cst_43 = arith.constant dense<0.000000e+00> : vector<2x128xf32>
    %111 = tpu.matmul %110, %86, %cst_43 {dimension_numbers = #tpu.dot_dimension_numbers<[1], [0], [0], [1], [0, 0, 1, 1], [], []>} : vector<2x8xf32>, vector<8x128xf32>, vector<2x128xf32> -> vector<2x128xf32>
    %112 = vector.extract_strided_slice %111 {offsets = [0, 0], sizes = [1, 128], strides = [1, 1]} : vector<2x128xf32> to vector<1x128xf32>
    %113 = vector.broadcast %112 : vector<1x128xf32> to vector<32x128xf32>
    %114 = arith.mulf %83, %113 : vector<32x128xf32>
    %115 = vector.extract_strided_slice %111 {offsets = [1, 0], sizes = [1, 128], strides = [1, 1]} : vector<2x128xf32> to vector<1x128xf32>
    %116 = vector.broadcast %115 : vector<1x128xf32> to vector<32x128xf32>
    %117 = arith.addf %114, %116 : vector<32x128xf32>
    %cst_44 = arith.constant 0.000000e+00 : f32
    %118 = vector.broadcast %cst_44 : f32 to vector<32x128xf32>
    %119 = arith.maximumf %117, %118 : vector<32x128xf32>
    %c0_45 = arith.constant 0 : index
    %c0_46 = arith.constant 0 : index
    %120 = vector.load %arg7[%c0_45, %c0_46] : memref<32x128xf32, #tpu.memory_space<vmem>>, vector<32x128xf32>
    tpu.vector_store %arg7[%c0_45, %c0_46], %119 {strides = array<i32>} : memref<32x128xf32, #tpu.memory_space<vmem>>, vector<32x128xf32>,
    return
  }
}

</mosaic_0001>

<llo_original>
// kernel: double_conv.1
$region0: #{double_conv.1}
  #allocation0 [shape = 'u32[]', space=smem, size = 0x4, offset = 0x4, fixed_abs, tag = 'smem constant byte address 0x4 - core index']
  #allocation1 [shape = 'u32[144,128]{1,0:T(1,128)}', space=vmem, size = 0x12000, scoped, tag = 'internal scratch']
  %s0 = inlined_call_operand.vmem [shape: f32[32,128], index: 0, kind: input, shape index: {}]
  %s1 = inlined_call_operand.vmem [shape: f32[384,128], index: 1, kind: input, shape index: {}]
  %s2 = inlined_call_operand.vmem [shape: f32[2,8], index: 2, kind: input, shape index: {}]
  %s3 = inlined_call_operand.vmem [shape: f32[384,128], index: 3, kind: input, shape index: {}]
  %s4 = inlined_call_operand.vmem [shape: f32[2,8], index: 4, kind: input, shape index: {}]
  %s5 = inlined_call_operand.vmem [shape: f32[128,8], index: 5, kind: input, shape index: {}]
  %s6 = inlined_call_operand.vmem [shape: f32[8,128], index: 6, kind: input, shape index: {}]
  %s7 = inlined_call_operand.vmem [shape: f32[32,128], index: 7, kind: output, shape index: {}]
  %s8 = sld [smem:[#allocation0]]
  $region38: #{double_conv.1} parent=0
    _
  %s10 = ssub.s32 1, %s8
  %s11 = scalar_select 0, %s10, %s8
  // Predicated region
  $region2: #{double_conv.1} parent=0 // pred_check
    _
  $region3: #{double_conv.1} parent=0 // pred_check_branch
    %13 = sbr.rel (0) target = $region5
  $region4: #{double_conv.1} parent=0 // pred_region
    _
  $region5: #{double_conv.1} parent=0 // pred_fallthru
    _
  // Predicated region
  $region6: #{double_conv.1} parent=0 // pred_check
    _
  $region7: #{double_conv.1} parent=0 // pred_check_branch
    %15 = sbr.rel (0) target = $region9
  $region8: #{double_conv.1} parent=0 // pred_region
    _
  $region9: #{double_conv.1} parent=0 // pred_fallthru
    _
  // Predicated region
  $region10: #{double_conv.1} parent=0 // pred_check
    _
  $region11: #{double_conv.1} parent=0 // pred_check_branch
    %17 = sbr.rel (0) target = $region13
  $region12: #{double_conv.1} parent=0 // pred_region
    _
  $region13: #{double_conv.1} parent=0 // pred_fallthru
    _
  // Predicated region
  $region14: #{double_conv.1} parent=0 // pred_check
    _
  $region15: #{double_conv.1} parent=0 // pred_check_branch
    %19 = sbr.rel (0) target = $region17
  $region16: #{double_conv.1} parent=0 // pred_region
    _
  $region17: #{double_conv.1} parent=0 // pred_fallthru
    _
  // Predicated region
  $region18: #{double_conv.1} parent=0 // pred_check
    _
  $region19: #{double_conv.1} parent=0 // pred_check_branch
    %21 = sbr.rel (0) target = $region21
  $region20: #{double_conv.1} parent=0 // pred_region
    _
  $region21: #{double_conv.1} parent=0 // pred_fallthru
    _
  // Predicated region
  $region22: #{double_conv.1} parent=0 // pred_check
    _
  $region23: #{double_conv.1} parent=0 // pred_check_branch
    %23 = sbr.rel (0) target = $region25
  $region24: #{double_conv.1} parent=0 // pred_region
    _
  $region25: #{double_conv.1} parent=0 // pred_fallthru
    _
  // Predicated region
  $region26: #{double_conv.1} parent=0 // pred_check
    _
  $region27: #{double_conv.1} parent=0 // pred_check_branch
    %25 = sbr.rel (0) target = $region29
  $region28: #{double_conv.1} parent=0 // pred_region
    _
  $region29: #{double_conv.1} parent=0 // pred_fallthru
    _
  %v26 = vlaneseq
  %v27 = vshrl.u32 %v26, 7
  %v28 = vadd.s32 %v27, 8
  %v29 = vadd.s32 %v27, 16
  %v30 = vadd.s32 %v27, 24
  %vm31 = vcmp.lt.s32.totalorder %v27, 0
  %v32 = vsub.s32 0, %v27
  %v33 = vsel %vm31, %v32, %v27
  %v34 = vshrl.u32 %v33, 4
  %v35 = vand.u32 %v33, 15
  %v36 = vsub.s32 0, %v35
  %v37 = vsel %vm31, %v36, %v35
  %vm38 = vcmp.lt.s32.totalorder %v28, 0
  %v39 = vsub.s32 0, %v28
  %v40 = vsel %vm38, %v39, %v28
  %v41 = vshrl.u32 %v40, 4
  %v42 = vand.u32 %v40, 15
  %v43 = vsub.s32 0, %v42
  %v44 = vsel %vm38, %v43, %v42
  %vm45 = vcmp.lt.s32.totalorder %v29, 0
  %v46 = vsub.s32 0, %v29
  %v47 = vsel %vm45, %v46, %v29
  %v48 = vshrl.u32 %v47, 4
  %v49 = vand.u32 %v47, 15
  %v50 = vsub.s32 0, %v49
  %v51 = vsel %vm45, %v50, %v49
  %vm52 = vcmp.lt.s32.totalorder %v30, 0
  %v53 = vsub.s32 0, %v30
  %v54 = vsel %vm52, %v53, %v30
  %v55 = vshrl.u32 %v54, 4
  %v56 = vand.u32 %v54, 15
  %v57 = vsub.s32 0, %v56
  %v58 = vsel %vm52, %v57, %v56
  %vm59 = vcmp.ne.s32.totalorder %v37, 0
  %vm60 = vcmp.ne.s32.totalorder %v44, 0
  %vm61 = vcmp.ne.s32.totalorder %v51, 0
  %vm62 = vcmp.ne.s32.totalorder %v58, 0
  %vm63 = vcmp.lt.s32.totalorder %v37, 0
  %vm64 = vcmp.lt.s32.totalorder %v44, 0
  %vm65 = vcmp.lt.s32.totalorder %v51, 0
  %vm66 = vcmp.lt.s32.totalorder %v58, 0
  %vm67 = vmand %vm63, %vm59
  %vm68 = vmand %vm64, %vm60
  %vm69 = vmand %vm65, %vm61
  %vm70 = vmand %vm66, %vm62
  %v71 = vadd.s32 %v37, 16
  %v72 = vadd.s32 %v44, 16
  %v73 = vadd.s32 %v51, 16
  %v74 = vadd.s32 %v58, 16
  %v75 = vsel %vm67, %v71, %v37
  %v76 = vsel %vm68, %v72, %v44
  %v77 = vsel %vm69, %v73, %v51
  %v78 = vsel %vm70, %v74, %v58
  %vm79 = vcmp.eq.s32.totalorder %v75, 0
  %vm80 = vcmp.eq.s32.totalorder %v76, 0
  %vm81 = vcmp.eq.s32.totalorder %v77, 0
  %vm82 = vcmp.eq.s32.totalorder %v78, 0
  %vm83 = vcmp.eq.s32.totalorder %v75, 15
  %vm84 = vcmp.eq.s32.totalorder %v76, 15
  %vm85 = vcmp.eq.s32.totalorder %v77, 15
  %vm86 = vcmp.eq.s32.totalorder %v78, 15
  %v87 = vld [vmem:[%s0] sm:$0xff]
  %v88 = vld [vmem:[%s0 + $0x8] sm:$0xff]
  %v89 = vld [vmem:[%s0 + $0x10] sm:$0xff]
  %v90 = vld [vmem:[%s0 + $0x18] sm:$0xff]
  %v91 = vrot.slane %v87, 7
  %v92 = vrot.slane %v88, 7
  %v93 = vrot.slane %v89, 7
  %v94 = vrot.slane %v90, 7
  %vm95 = vcmp.lt.s32.totalorder %v27, 1
  %v96 = vsel %vm95, %v93, %v94
  %v97 = vsel %vm95, %v92, %v93
  %v98 = vsel %vm95, %v91, %v92
  %v99 = vsel %vm95, %v94, %v91
  %v100 = vsel %vm79, 1, 0
  %v101 = vsel %vm80, 1, 0
  %v102 = vsel %vm81, 1, 0
  %v103 = vsel %vm82, 1, 0
  %vm104 = vcmp.eq.s32.totalorder %v100, 1
  %vm105 = vcmp.eq.s32.totalorder %v101, 1
  %vm106 = vcmp.eq.s32.totalorder %v102, 1
  %vm107 = vcmp.eq.s32.totalorder %v103, 1
  %v108 = vsel %vm104, 0.0, %v99
  %v109 = vsel %vm105, 0.0, %v98
  %v110 = vsel %vm106, 0.0, %v97
  %v111 = vsel %vm107, 0.0, %v96
  %v112 = vrot.slane %v87, 1
  %v113 = vrot.slane %v88, 1
  %v114 = vrot.slane %v89, 1
  %v115 = vrot.slane %v90, 1
  %vm116 = vcmp.lt.s32.totalorder %v27, 7
  %v117 = vsel %vm116, %v114, %v115
  %v118 = vsel %vm116, %v113, %v114
  %v119 = vsel %vm116, %v112, %v113
  %v120 = vsel %vm116, %v115, %v112
  %v121 = vsel %vm83, 1, 0
  %v122 = vsel %vm84, 1, 0
  %v123 = vsel %vm85, 1, 0
  %v124 = vsel %vm86, 1, 0
  %vm125 = vcmp.eq.s32.totalorder %v121, 1
  %vm126 = vcmp.eq.s32.totalorder %v122, 1
  %vm127 = vcmp.eq.s32.totalorder %v123, 1
  %vm128 = vcmp.eq.s32.totalorder %v124, 1
  %v129 = vsel %vm125, 0.0, %v119
  %v130 = vsel %vm126, 0.0, %v118
  %v131 = vsel %vm127, 0.0, %v117
  %v132 = vsel %vm128, 0.0, %v120
  %v133 = vld [vmem:[%s1] sm:$0xff]
  %v134 = vld [vmem:[%s1 + $0x8] sm:$0xff]
  %v135 = vld [vmem:[%s1 + $0x10] sm:$0xff]
  %v136 = vld [vmem:[%s1 + $0x18] sm:$0xff]
  %v137 = vld [vmem:[%s1 + $0x20] sm:$0xff]
  %v138 = vld [vmem:[%s1 + $0x28] sm:$0xff]
  %v139 = vld [vmem:[%s1 + $0x30] sm:$0xff]
  %v140 = vld [vmem:[%s1 + $0x38] sm:$0xff]
  %v141 = vld [vmem:[%s1 + $0x40] sm:$0xff]
  %v142 = vld [vmem:[%s1 + $0x48] sm:$0xff]
  %v143 = vld [vmem:[%s1 + $0x50] sm:$0xff]
  %v144 = vld [vmem:[%s1 + $0x58] sm:$0xff]
  %v145 = vld [vmem:[%s1 + $0x60] sm:$0xff]
  %v146 = vld [vmem:[%s1 + $0x68] sm:$0xff]
  %v147 = vld [vmem:[%s1 + $0x70] sm:$0xff]
  %v148 = vld [vmem:[%s1 + $0x78] sm:$0xff]
  %v149 = vld [vmem:[%s1 + $0x80] sm:$0xff]
  %v150 = vld [vmem:[%s1 + $0x88] sm:$0xff]
  %v151 = vld [vmem:[%s1 + $0x90] sm:$0xff]
  %v152 = vld [vmem:[%s1 + $0x98] sm:$0xff]
  %v153 = vld [vmem:[%s1 + $0xa0] sm:$0xff]
  %v154 = vld [vmem:[%s1 + $0xa8] sm:$0xff]
  %v155 = vld [vmem:[%s1 + $0xb0] sm:$0xff]
  %v156 = vld [vmem:[%s1 + $0xb8] sm:$0xff]
  %v157 = vld [vmem:[%s1 + $0xc0] sm:$0xff]
  %v158 = vld [vmem:[%s1 + $0xc8] sm:$0xff]
  %v159 = vld [vmem:[%s1 + $0xd0] sm:$0xff]
  %v160 = vld [vmem:[%s1 + $0xd8] sm:$0xff]
  %v161 = vld [vmem:[%s1 + $0xe0] sm:$0xff]
  %v162 = vld [vmem:[%s1 + $0xe8] sm:$0xff]
  %v163 = vld [vmem:[%s1 + $0xf0] sm:$0xff]
  %v164 = vld [vmem:[%s1 + $0xf8] sm:$0xff]
  %v165 = vld [vmem:[%s1 + $0x100] sm:$0xff]
  %v166 = vld [vmem:[%s1 + $0x108] sm:$0xff]
  %v167 = vld [vmem:[%s1 + $0x110] sm:$0xff]
  %v168 = vld [vmem:[%s1 + $0x118] sm:$0xff]
  %v169 = vld [vmem:[%s1 + $0x120] sm:$0xff]
  %v170 = vld [vmem:[%s1 + $0x128] sm:$0xff]
  %v171 = vld [vmem:[%s1 + $0x130] sm:$0xff]
  %v172 = vld [vmem:[%s1 + $0x138] sm:$0xff]
  %v173 = vld [vmem:[%s1 + $0x140] sm:$0xff]
  %v174 = vld [vmem:[%s1 + $0x148] sm:$0xff]
  %v175 = vld [vmem:[%s1 + $0x150] sm:$0xff]
  %v176 = vld [vmem:[%s1 + $0x158] sm:$0xff]
  %v177 = vld [vmem:[%s1 + $0x160] sm:$0xff]
  %v178 = vld [vmem:[%s1 + $0x168] sm:$0xff]
  %v179 = vld [vmem:[%s1 + $0x170] sm:$0xff]
  %v180 = vld [vmem:[%s1 + $0x178] sm:$0xff]
  %181 = vmatprep.subr.mxu0 0.0
  %182 = vmatpush1.msra.mxu0 %v148
  %183 = vmatprep.subr.mxu0 0.0
  %184 = vmatpush1.msra.mxu0 %v147
  %185 = vmatprep.subr.mxu0 0.0
  %186 = vmatpush1.msra.mxu0 %v146
  %187 = vmatprep.subr.mxu0 0.0
  %188 = vmatpush1.msra.mxu0 %v145
  %189 = vmatprep.subr.mxu0 0.0
  %190 = vmatpush1.msra.mxu0 %v144
  %191 = vmatprep.subr.mxu0 0.0
  %192 = vmatpush1.msra.mxu0 %v143
  %193 = vmatprep.subr.mxu0 0.0
  %194 = vmatpush1.msra.mxu0 %v142
  %195 = vmatprep.subr.mxu0 0.0
  %196 = vmatpush1.msra.mxu0 %v141
  %197 = vmatprep.subr.mxu0 0.0
  %198 = vmatpush1.msra.mxu0 %v140
  %199 = vmatprep.subr.mxu0 0.0
  %200 = vmatpush1.msra.mxu0 %v139
  %201 = vmatprep.subr.mxu0 0.0
  %202 = vmatpush1.msra.mxu0 %v138
  %203 = vmatprep.subr.mxu0 0.0
  %204 = vmatpush1.msra.mxu0 %v137
  %205 = vmatprep.subr.mxu0 0.0
  %206 = vmatpush1.msra.mxu0 %v136
  %207 = vmatprep.subr.mxu0 0.0
  %208 = vmatpush1.msra.mxu0 %v135
  %209 = vmatprep.subr.mxu0 0.0
  %210 = vmatpush1.msra.mxu0 %v134
  %211 = vmatprep.subr.mxu0 0.0
  %212 = vmatpush1.msra.mxu0 %v133
  %213 = vmatprep.subr.mxu0 0.0
  %214 = vmatpush2.msra.mxu0 %v164
  %215 = vmatprep.subr.mxu0 0.0
  %216 = vmatpush2.msra.mxu0 %v163
  %217 = vmatprep.subr.mxu0 0.0
  %218 = vmatpush2.msra.mxu0 %v162
  %219 = vmatprep.subr.mxu0 0.0
  %220 = vmatpush2.msra.mxu0 %v161
  %221 = vmatprep.subr.mxu0 0.0
  %222 = vmatpush2.msra.mxu0 %v160
  %223 = vmatprep.subr.mxu0 0.0
  %224 = vmatpush2.msra.mxu0 %v159
  %225 = vmatprep.subr.mxu0 0.0
  %226 = vmatpush2.msra.mxu0 %v158
  %227 = vmatprep.subr.mxu0 0.0
  %228 = vmatpush2.msra.mxu0 %v157
  %229 = vmatprep.subr.mxu0 0.0
  %230 = vmatpush2.msra.mxu0 %v156
  %231 = vmatprep.subr.mxu0 0.0
  %232 = vmatpush2.msra.mxu0 %v155
  %233 = vmatprep.subr.mxu0 0.0
  %234 = vmatpush2.msra.mxu0 %v154
  %235 = vmatprep.subr.mxu0 0.0
  %236 = vmatpush2.msra.mxu0 %v153
  %237 = vmatprep.subr.mxu0 0.0
  %238 = vmatpush2.msra.mxu0 %v152
  %239 = vmatprep.subr.mxu0 0.0
  %240 = vmatpush2.msra.mxu0 %v151
  %241 = vmatprep.subr.mxu0 0.0
  %242 = vmatpush2.msra.mxu0 %v150
  %243 = vmatprep.subr.mxu0 0.0
  %244 = vmatpush2.msra.mxu0 %v149
  %245 = vmatprep.mubr.f32.mxu0 %v87
  %246 = vmatmul.mubr.f32.gmra.mxu0 %v108
  %v247 = vpop.f32.mrf.mxu0
  %v248 = vadd.f32 0.0, %v247
  %v249 = vpop.f32.mrf.mxu0
  %250 = vmatprep.mubr.f32.mxu0 %v88
  %251 = vmatmul.mubr.f32.gmra.mxu0 %v109
  %v252 = vpop.f32.mrf.mxu0
  %v253 = vadd.f32 0.0, %v252
  %v254 = vpop.f32.mrf.mxu0
  %255 = vmatprep.mubr.f32.mxu0 %v89
  %256 = vmatmul.mubr.f32.gmra.mxu0 %v110
  %v257 = vpop.f32.mrf.mxu0
  %v258 = vadd.f32 0.0, %v257
  %v259 = vpop.f32.mrf.mxu0
  %260 = vmatprep.mubr.f32.mxu0 %v90
  %261 = vmatmul.mubr.f32.gmra.mxu0 %v111
  %v262 = vpop.f32.mrf.mxu0
  %v263 = vadd.f32 0.0, %v262
  %v264 = vpop.f32.mrf.mxu0
  %265 = vdwg.mxu0
  %266 = vmatprep.subr.mxu0 0.0
  %267 = vmatpush1.msra.mxu0 %v180
  %268 = vmatprep.subr.mxu0 0.0
  %269 = vmatpush1.msra.mxu0 %v179
  %270 = vmatprep.subr.mxu0 0.0
  %271 = vmatpush1.msra.mxu0 %v178
  %272 = vmatprep.subr.mxu0 0.0
  %273 = vmatpush1.msra.mxu0 %v177
  %274 = vmatprep.subr.mxu0 0.0
  %275 = vmatpush1.msra.mxu0 %v176
  %276 = vmatprep.subr.mxu0 0.0
  %277 = vmatpush1.msra.mxu0 %v175
  %278 = vmatprep.subr.mxu0 0.0
  %279 = vmatpush1.msra.mxu0 %v174
  %280 = vmatprep.subr.mxu0 0.0
  %281 = vmatpush1.msra.mxu0 %v173
  %282 = vmatprep.subr.mxu0 0.0
  %283 = vmatpush1.msra.mxu0 %v172
  %284 = vmatprep.subr.mxu0 0.0
  %285 = vmatpush1.msra.mxu0 %v171
  %286 = vmatprep.subr.mxu0 0.0
  %287 = vmatpush1.msra.mxu0 %v170
  %288 = vmatprep.subr.mxu0 0.0
  %289 = vmatpush1.msra.mxu0 %v169
  %290 = vmatprep.subr.mxu0 0.0
  %291 = vmatpush1.msra.mxu0 %v168
  %292 = vmatprep.subr.mxu0 0.0
  %293 = vmatpush1.msra.mxu0 %v167
  %294 = vmatprep.subr.mxu0 0.0
  %295 = vmatpush1.msra.mxu0 %v166
  %296 = vmatprep.subr.mxu0 0.0
  %297 = vmatpush1.msra.mxu0 %v165
  %298 = vmatprep.subr.mxu0 0.0
  %299 = vmatpush2.msra.mxu0 0.0
  %300 = vmatprep.subr.mxu0 0.0
  %301 = vmatpush2.msra.mxu0 0.0
  %302 = vmatprep.subr.mxu0 0.0
  %303 = vmatpush2.msra.mxu0 0.0
  %304 = vmatprep.subr.mxu0 0.0
  %305 = vmatpush2.msra.mxu0 0.0
  %306 = vmatprep.subr.mxu0 0.0
  %307 = vmatpush2.msra.mxu0 0.0
  %308 = vmatprep.subr.mxu0 0.0
  %309 = vmatpush2.msra.mxu0 0.0
  %310 = vmatprep.subr.mxu0 0.0
  %311 = vmatpush2.msra.mxu0 0.0
  %312 = vmatprep.subr.mxu0 0.0
  %313 = vmatpush2.msra.mxu0 0.0
  %314 = vmatprep.subr.mxu0 0.0
  %315 = vmatpush2.msra.mxu0 0.0
  %316 = vmatprep.subr.mxu0 0.0
  %317 = vmatpush2.msra.mxu0 0.0
  %318 = vmatprep.subr.mxu0 0.0
  %319 = vmatpush2.msra.mxu0 0.0
  %320 = vmatprep.subr.mxu0 0.0
  %321 = vmatpush2.msra.mxu0 0.0
  %322 = vmatprep.subr.mxu0 0.0
  %323 = vmatpush2.msra.mxu0 0.0
  %324 = vmatprep.subr.mxu0 0.0
  %325 = vmatpush2.msra.mxu0 0.0
  %326 = vmatprep.subr.mxu0 0.0
  %327 = vmatpush2.msra.mxu0 0.0
  %328 = vmatprep.subr.mxu0 0.0
  %329 = vmatpush2.msra.mxu0 0.0
  %330 = vmatprep.mubr.f32.mxu0 0.0
  %331 = vmatmul.mubr.f32.gmra.mxu0 %v129
  %v332 = vpop.f32.mrf.mxu0
  %v333 = vadd.f32 %v248, %v332
  %v334 = vpop.f32.mrf.mxu0
  %335 = vmatprep.mubr.f32.mxu0 0.0
  %336 = vmatmul.mubr.f32.gmra.mxu0 %v130
  %v337 = vpop.f32.mrf.mxu0
  %v338 = vadd.f32 %v253, %v337
  %v339 = vpop.f32.mrf.mxu0
  %340 = vmatprep.mubr.f32.mxu0 0.0
  %341 = vmatmul.mubr.f32.gmra.mxu0 %v131
  %v342 = vpop.f32.mrf.mxu0
  %v343 = vadd.f32 %v258, %v342
  %v344 = vpop.f32.mrf.mxu0
  %345 = vmatprep.mubr.f32.mxu0 0.0
  %346 = vmatmul.mubr.f32.gmra.mxu0 %v132
  %v347 = vpop.f32.mrf.mxu0
  %v348 = vadd.f32 %v263, %v347
  %v349 = vpop.f32.mrf.mxu0
  %350 = vdwg.mxu0
  %v351 = vld [vmem:[%s2] sm:$0x3]
  %v352 = vld [vmem:[%s5] sm:$0xff]
  %v353 = vld [vmem:[%s5 + $0x8] sm:$0xff]
  %v354 = vld [vmem:[%s5 + $0x10] sm:$0xff]
  %v355 = vld [vmem:[%s5 + $0x18] sm:$0xff]
  %v356 = vld [vmem:[%s5 + $0x20] sm:$0xff]
  %v357 = vld [vmem:[%s5 + $0x28] sm:$0xff]
  %v358 = vld [vmem:[%s5 + $0x30] sm:$0xff]
  %v359 = vld [vmem:[%s5 + $0x38] sm:$0xff]
  %v360 = vld [vmem:[%s5 + $0x40] sm:$0xff]
  %v361 = vld [vmem:[%s5 + $0x48] sm:$0xff]
  %v362 = vld [vmem:[%s5 + $0x50] sm:$0xff]
  %v363 = vld [vmem:[%s5 + $0x58] sm:$0xff]
  %v364 = vld [vmem:[%s5 + $0x60] sm:$0xff]
  %v365 = vld [vmem:[%s5 + $0x68] sm:$0xff]
  %v366 = vld [vmem:[%s5 + $0x70] sm:$0xff]
  %v367 = vld [vmem:[%s5 + $0x78] sm:$0xff]
  %v368 = vld [vmem:[%s6] sm:$0xff]
  %v369 = vadd.f32 %v333, %v338
  %v370 = vadd.f32 %v369, %v343
  %v371 = vadd.f32 %v370, %v348
  %v372 = vrot.slane %v371, 4
  %v373 = vadd.f32 %v371, %v372
  %v374 = vrot.slane %v373, 2
  %v375 = vadd.f32 %v373, %v374
  %v376 = vrot.slane %v375, 1
  %v377 = vadd.f32 %v375, %v376
  %v378 = vmul.f32 %v333, %v333
  %v379 = vmul.f32 %v338, %v338
  %v380 = vmul.f32 %v343, %v343
  %v381 = vmul.f32 %v348, %v348
  %v382 = vadd.f32 %v378, %v379
  %v383 = vadd.f32 %v382, %v380
  %v384 = vadd.f32 %v383, %v381
  %v385 = vrot.slane %v384, 4
  %v386 = vadd.f32 %v384, %v385
  %v387 = vrot.slane %v386, 2
  %v388 = vadd.f32 %v386, %v387
  %v389 = vrot.slane %v388, 1
  %v390 = vadd.f32 %v388, %v389
  %vm391 = vcmask 1040384
  %v392 = vsel %vm391, %v377, %v390
  %393 = vmatprep.subr.mxu0 0.0
  %394 = vmatpush1.msra.mxu0 %v367
  %395 = vmatprep.subr.mxu0 0.0
  %396 = vmatpush1.msra.mxu0 %v366
  %397 = vmatprep.subr.mxu0 0.0
  %398 = vmatpush1.msra.mxu0 %v365
  %399 = vmatprep.subr.mxu0 0.0
  %400 = vmatpush1.msra.mxu0 %v364
  %401 = vmatprep.subr.mxu0 0.0
  %402 = vmatpush1.msra.mxu0 %v363
  %403 = vmatprep.subr.mxu0 0.0
  %404 = vmatpush1.msra.mxu0 %v362
  %405 = vmatprep.subr.mxu0 0.0
  %406 = vmatpush1.msra.mxu0 %v361
  %407 = vmatprep.subr.mxu0 0.0
  %408 = vmatpush1.msra.mxu0 %v360
  %409 = vmatprep.subr.mxu0 0.0
  %410 = vmatpush1.msra.mxu0 %v359
  %411 = vmatprep.subr.mxu0 0.0
  %412 = vmatpush1.msra.mxu0 %v358
  %413 = vmatprep.subr.mxu0 0.0
  %414 = vmatpush1.msra.mxu0 %v357
  %415 = vmatprep.subr.mxu0 0.0
  %416 = vmatpush1.msra.mxu0 %v356
  %417 = vmatprep.subr.mxu0 0.0
  %418 = vmatpush1.msra.mxu0 %v355
  %419 = vmatprep.subr.mxu0 0.0
  %420 = vmatpush1.msra.mxu0 %v354
  %421 = vmatprep.subr.mxu0 0.0
  %422 = vmatpush1.msra.mxu0 %v353
  %423 = vmatprep.subr.mxu0 0.0
  %424 = vmatpush1.msra.mxu0 %v352
  %425 = vmatprep.subr.mxu0 0.0
  %426 = vmatpush2.msra.mxu0 0.0
  %427 = vmatprep.subr.mxu0 0.0
  %428 = vmatpush2.msra.mxu0 0.0
  %429 = vmatprep.subr.mxu0 0.0
  %430 = vmatpush2.msra.mxu0 0.0
  %431 = vmatprep.subr.mxu0 0.0
  %432 = vmatpush2.msra.mxu0 0.0
  %433 = vmatprep.subr.mxu0 0.0
  %434 = vmatpush2.msra.mxu0 0.0
  %435 = vmatprep.subr.mxu0 0.0
  %436 = vmatpush2.msra.mxu0 0.0
  %437 = vmatprep.subr.mxu0 0.0
  %438 = vmatpush2.msra.mxu0 0.0
  %439 = vmatprep.subr.mxu0 0.0
  %440 = vmatpush2.msra.mxu0 0.0
  %441 = vmatprep.subr.mxu0 0.0
  %442 = vmatpush2.msra.mxu0 0.0
  %443 = vmatprep.subr.mxu0 0.0
  %444 = vmatpush2.msra.mxu0 0.0
  %445 = vmatprep.subr.mxu0 0.0
  %446 = vmatpush2.msra.mxu0 0.0
  %447 = vmatprep.subr.mxu0 0.0
  %448 = vmatpush2.msra.mxu0 0.0
  %449 = vmatprep.subr.mxu0 0.0
  %450 = vmatpush2.msra.mxu0 0.0
  %451 = vmatprep.subr.mxu0 0.0
  %452 = vmatpush2.msra.mxu0 0.0
  %453 = vmatprep.subr.mxu0 0.0
  %454 = vmatpush2.msra.mxu0 0.0
  %455 = vmatprep.subr.mxu0 0.0
  %456 = vmatpush2.msra.mxu0 0.0
  %457 = vmatprep.mubr.f32.mxu0 0.0
  %458 = vmatmul.mubr.f32.gmra.mxu0 %v392
  %v459 = vpop.f32.mrf.mxu0
  %v460 = vadd.f32 0.0, %v459
  %v461 = vpop.f32.mrf.mxu0
  %462 = vdwg.mxu0
  %v463 = vmul.f32 %v460, 0.001953125
  %v464 = vmul.f32 %v463, %v463
  %v466 = vrot.slane %v464, 7
  %v468 = vsub.f32 %v463, %v466
  %v469 = vadd.f32 %v468, 1e-05
  %v470 = vrsqrt.pop %v469
  %v472 = vrot.slane %v470, 1
  %v474 = vmul.f32 %v351, %v472
  %v475 = vmul.f32 %v463, %v474
  %v477 = vrot.slane %v475, 7
  %v479 = vsub.f32 %v351, %v477
  %v480 = vsel %vm391, %v474, %v479
  %vm481 = vcmask 64512
  %v483 = vsel %vm481, %v480, 0
  %485 = vmatprep.subr.mxu0 0.0
  %486 = vmatpush1.msra.mxu0 0.0
  %487 = vmatprep.subr.mxu0 0.0
  %488 = vmatpush1.msra.mxu0 0.0
  %489 = vmatprep.subr.mxu0 0.0
  %490 = vmatpush1.msra.mxu0 0.0
  %491 = vmatprep.subr.mxu0 0.0
  %492 = vmatpush1.msra.mxu0 0.0
  %493 = vmatprep.subr.mxu0 0.0
  %494 = vmatpush1.msra.mxu0 0.0
  %495 = vmatprep.subr.mxu0 0.0
  %496 = vmatpush1.msra.mxu0 0.0
  %497 = vmatprep.subr.mxu0 0.0
  %498 = vmatpush1.msra.mxu0 0.0
  %499 = vmatprep.subr.mxu0 0.0
  %500 = vmatpush1.msra.mxu0 0.0
  %501 = vmatprep.subr.mxu0 0.0
  %502 = vmatpush1.msra.mxu0 0.0
  %503 = vmatprep.subr.mxu0 0.0
  %504 = vmatpush1.msra.mxu0 0.0
  %505 = vmatprep.subr.mxu0 0.0
  %506 = vmatpush1.msra.mxu0 0.0
  %507 = vmatprep.subr.mxu0 0.0
  %508 = vmatpush1.msra.mxu0 0.0
  %509 = vmatprep.subr.mxu0 0.0
  %510 = vmatpush1.msra.mxu0 0.0
  %511 = vmatprep.subr.mxu0 0.0
  %512 = vmatpush1.msra.mxu0 0.0
  %513 = vmatprep.subr.mxu0 0.0
  %514 = vmatpush1.msra.mxu0 0.0
  %515 = vmatprep.subr.mxu0 0.0
  %516 = vmatpush1.msra.mxu0 %v368
  %517 = vmatprep.subr.mxu0 0.0
  %518 = vmatpush2.msra.mxu0 0.0
  %519 = vmatprep.subr.mxu0 0.0
  %520 = vmatpush2.msra.mxu0 0.0
  %521 = vmatprep.subr.mxu0 0.0
  %522 = vmatpush2.msra.mxu0 0.0
  %523 = vmatprep.subr.mxu0 0.0
  %524 = vmatpush2.msra.mxu0 0.0
  %525 = vmatprep.subr.mxu0 0.0
  %526 = vmatpush2.msra.mxu0 0.0
  %527 = vmatprep.subr.mxu0 0.0
  %528 = vmatpush2.msra.mxu0 0.0
  %529 = vmatprep.subr.mxu0 0.0
  %530 = vmatpush2.msra.mxu0 0.0
  %531 = vmatprep.subr.mxu0 0.0
  %532 = vmatpush2.msra.mxu0 0.0
  %533 = vmatprep.subr.mxu0 0.0
  %534 = vmatpush2.msra.mxu0 0.0
  %535 = vmatprep.subr.mxu0 0.0
  %536 = vmatpush2.msra.mxu0 0.0
  %537 = vmatprep.subr.mxu0 0.0
  %538 = vmatpush2.msra.mxu0 0.0
  %539 = vmatprep.subr.mxu0 0.0
  %540 = vmatpush2.msra.mxu0 0.0
  %541 = vmatprep.subr.mxu0 0.0
  %542 = vmatpush2.msra.mxu0 0.0
  %543 = vmatprep.subr.mxu0 0.0
  %544 = vmatpush2.msra.mxu0 0.0
  %545 = vmatprep.subr.mxu0 0.0
  %546 = vmatpush2.msra.mxu0 0.0
  %547 = vmatprep.subr.mxu0 0.0
  %548 = vmatpush2.msra.mxu0 0.0
  %549 = vmatprep.mubr.f32.mxu0 0.0
  %550 = vmatmul.mubr.f32.gmra.mxu0 %v483
  %v551 = vpop.f32.mrf.mxu0
  %v552 = vadd.f32 0.0, %v551
  %v553 = vpop.f32.mrf.mxu0
  %554 = vdwg.mxu0
  %v555 = vlaneseq
  %v556 = vshrl.u32 %v555, 7
  %v557 = vsub.s32 0, %v556
  %v558 = vrot.slane %v552, %v557
  %v559 = vmul.f32 %v333, %v558
  %v560 = vmul.f32 %v338, %v558
  %v561 = vmul.f32 %v343, %v558
  %v562 = vmul.f32 %v348, %v558
  %v563 = vlaneseq
  %v564 = vshrl.u32 %v563, 7
  %v565 = vsub.s32 1, %v564
  %v566 = vrot.slane %v552, %v565
  %v567 = vadd.f32 %v559, %v566
  %v568 = vadd.f32 %v560, %v566
  %v569 = vadd.f32 %v561, %v566
  %v570 = vadd.f32 %v562, %v566
  %v571 = vmax.f32 %v567, 0.0
  %v572 = vmax.f32 %v568, 0.0
  %v573 = vmax.f32 %v569, 0.0
  %v574 = vmax.f32 %v570, 0.0
  %v575 = vrot.slane %v571, 7
  %v576 = vrot.slane %v572, 7
  %v577 = vrot.slane %v573, 7
  %v578 = vrot.slane %v574, 7
  %v579 = vsel %vm95, %v577, %v578
  %v580 = vsel %vm95, %v576, %v577
  %v581 = vsel %vm95, %v575, %v576
  %v582 = vsel %vm95, %v578, %v575
  %v583 = vsel %vm104, 0.0, %v582
  %v584 = vsel %vm105, 0.0, %v581
  %v585 = vsel %vm106, 0.0, %v580
  %v586 = vsel %vm107, 0.0, %v579
  %v587 = vrot.slane %v571, 1
  %v588 = vrot.slane %v572, 1
  %v589 = vrot.slane %v573, 1
  %v590 = vrot.slane %v574, 1
  %v591 = vsel %vm116, %v589, %v590
  %v592 = vsel %vm116, %v588, %v589
  %v593 = vsel %vm116, %v587, %v588
  %v594 = vsel %vm116, %v590, %v587
  %v595 = vsel %vm125, 0.0, %v593
  %v596 = vsel %vm126, 0.0, %v592
  %v597 = vsel %vm127, 0.0, %v591
  %v598 = vsel %vm128, 0.0, %v594
  %v599 = vld [vmem:[%s3] sm:$0xff]
  %v600 = vld [vmem:[%s3 + $0x8] sm:$0xff]
  %v601 = vld [vmem:[%s3 + $0x10] sm:$0xff]
  %v602 = vld [vmem:[%s3 + $0x18] sm:$0xff]
  %v603 = vld [vmem:[%s3 + $0x20] sm:$0xff]
  %v604 = vld [vmem:[%s3 + $0x28] sm:$0xff]
  %v605 = vld [vmem:[%s3 + $0x30] sm:$0xff]
  %v606 = vld [vmem:[%s3 + $0x38] sm:$0xff]
  %v607 = vld [vmem:[%s3 + $0x40] sm:$0xff]
  %v608 = vld [vmem:[%s3 + $0x48] sm:$0xff]
  %v609 = vld [vmem:[%s3 + $0x50] sm:$0xff]
  %v610 = vld [vmem:[%s3 + $0x58] sm:$0xff]
  %v611 = vld [vmem:[%s3 + $0x60] sm:$0xff]
  %v612 = vld [vmem:[%s3 + $0x68] sm:$0xff]
  %v613 = vld [vmem:[%s3 + $0x70] sm:$0xff]
  %v614 = vld [vmem:[%s3 + $0x78] sm:$0xff]
  %v615 = vld [vmem:[%s3 + $0x80] sm:$0xff]
  %v616 = vld [vmem:[%s3 + $0x88] sm:$0xff]
  %v617 = vld [vmem:[%s3 + $0x90] sm:$0xff]
  %v618 = vld [vmem:[%s3 + $0x98] sm:$0xff]
  %v619 = vld [vmem:[%s3 + $0xa0] sm:$0xff]
  %v620 = vld [vmem:[%s3 + $0xa8] sm:$0xff]
  %v621 = vld [vmem:[%s3 + $0xb0] sm:$0xff]
  %v622 = vld [vmem:[%s3 + $0xb8] sm:$0xff]
  %v623 = vld [vmem:[%s3 + $0xc0] sm:$0xff]
  %v624 = vld [vmem:[%s3 + $0xc8] sm:$0xff]
  %v625 = vld [vmem:[%s3 + $0xd0] sm:$0xff]
  %v626 = vld [vmem:[%s3 + $0xd8] sm:$0xff]
  %v627 = vld [vmem:[%s3 + $0xe0] sm:$0xff]
  %v628 = vld [vmem:[%s3 + $0xe8] sm:$0xff]
  %v629 = vld [vmem:[%s3 + $0xf0] sm:$0xff]
  %v630 = vld [vmem:[%s3 + $0xf8] sm:$0xff]
  %v631 = vld [vmem:[%s3 + $0x100] sm:$0xff]
  %v632 = vld [vmem:[%s3 + $0x108] sm:$0xff]
  %v633 = vld [vmem:[%s3 + $0x110] sm:$0xff]
  %v634 = vld [vmem:[%s3 + $0x118] sm:$0xff]
  %v635 = vld [vmem:[%s3 + $0x120] sm:$0xff]
  %v636 = vld [vmem:[%s3 + $0x128] sm:$0xff]
  %v637 = vld [vmem:[%s3 + $0x130] sm:$0xff]
  %v638 = vld [vmem:[%s3 + $0x138] sm:$0xff]
  %v639 = vld [vmem:[%s3 + $0x140] sm:$0xff]
  %v640 = vld [vmem:[%s3 + $0x148] sm:$0xff]
  %v641 = vld [vmem:[%s3 + $0x150] sm:$0xff]
  %v642 = vld [vmem:[%s3 + $0x158] sm:$0xff]
  %v643 = vld [vmem:[%s3 + $0x160] sm:$0xff]
  %v644 = vld [vmem:[%s3 + $0x168] sm:$0xff]
  %v645 = vld [vmem:[%s3 + $0x170] sm:$0xff]
  %v646 = vld [vmem:[%s3 + $0x178] sm:$0xff]
  %647 = vmatprep.subr.mxu0 0.0
  %648 = vmatpush1.msra.mxu0 %v614
  %649 = vmatprep.subr.mxu0 0.0
  %650 = vmatpush1.msra.mxu0 %v613
  %651 = vmatprep.subr.mxu0 0.0
  %652 = vmatpush1.msra.mxu0 %v612
  %653 = vmatprep.subr.mxu0 0.0
  %654 = vmatpush1.msra.mxu0 %v611
  %655 = vmatprep.subr.mxu0 0.0
  %656 = vmatpush1.msra.mxu0 %v610
  %657 = vmatprep.subr.mxu0 0.0
  %658 = vmatpush1.msra.mxu0 %v609
  %659 = vmatprep.subr.mxu0 0.0
  %660 = vmatpush1.msra.mxu0 %v608
  %661 = vmatprep.subr.mxu0 0.0
  %662 = vmatpush1.msra.mxu0 %v607
  %663 = vmatprep.subr.mxu0 0.0
  %664 = vmatpush1.msra.mxu0 %v606
  %665 = vmatprep.subr.mxu0 0.0
  %666 = vmatpush1.msra.mxu0 %v605
  %667 = vmatprep.subr.mxu0 0.0
  %668 = vmatpush1.msra.mxu0 %v604
  %669 = vmatprep.subr.mxu0 0.0
  %670 = vmatpush1.msra.mxu0 %v603
  %671 = vmatprep.subr.mxu0 0.0
  %672 = vmatpush1.msra.mxu0 %v602
  %673 = vmatprep.subr.mxu0 0.0
  %674 = vmatpush1.msra.mxu0 %v601
  %675 = vmatprep.subr.mxu0 0.0
  %676 = vmatpush1.msra.mxu0 %v600
  %677 = vmatprep.subr.mxu0 0.0
  %678 = vmatpush1.msra.mxu0 %v599
  %679 = vmatprep.subr.mxu0 0.0
  %680 = vmatpush2.msra.mxu0 %v630
  %681 = vmatprep.subr.mxu0 0.0
  %682 = vmatpush2.msra.mxu0 %v629
  %683 = vmatprep.subr.mxu0 0.0
  %684 = vmatpush2.msra.mxu0 %v628
  %685 = vmatprep.subr.mxu0 0.0
  %686 = vmatpush2.msra.mxu0 %v627
  %687 = vmatprep.subr.mxu0 0.0
  %688 = vmatpush2.msra.mxu0 %v626
  %689 = vmatprep.subr.mxu0 0.0
  %690 = vmatpush2.msra.mxu0 %v625
  %691 = vmatprep.subr.mxu0 0.0
  %692 = vmatpush2.msra.mxu0 %v624
  %693 = vmatprep.subr.mxu0 0.0
  %694 = vmatpush2.msra.mxu0 %v623
  %695 = vmatprep.subr.mxu0 0.0
  %696 = vmatpush2.msra.mxu0 %v622
  %697 = vmatprep.subr.mxu0 0.0
  %698 = vmatpush2.msra.mxu0 %v621
  %699 = vmatprep.subr.mxu0 0.0
  %700 = vmatpush2.msra.mxu0 %v620
  %701 = vmatprep.subr.mxu0 0.0
  %702 = vmatpush2.msra.mxu0 %v619
  %703 = vmatprep.subr.mxu0 0.0
  %704 = vmatpush2.msra.mxu0 %v618
  %705 = vmatprep.subr.mxu0 0.0
  %706 = vmatpush2.msra.mxu0 %v617
  %707 = vmatprep.subr.mxu0 0.0
  %708 = vmatpush2.msra.mxu0 %v616
  %709 = vmatprep.subr.mxu0 0.0
  %710 = vmatpush2.msra.mxu0 %v615
  %711 = vmatprep.mubr.f32.mxu0 %v571
  %712 = vmatmul.mubr.f32.gmra.mxu0 %v583
  %v713 = vpop.f32.mrf.mxu0
  %v714 = vadd.f32 0.0, %v713
  %v715 = vpop.f32.mrf.mxu0
  %716 = vmatprep.mubr.f32.mxu0 %v572
  %717 = vmatmul.mubr.f32.gmra.mxu0 %v584
  %v718 = vpop.f32.mrf.mxu0
  %v719 = vadd.f32 0.0, %v718
  %v720 = vpop.f32.mrf.mxu0
  %721 = vmatprep.mubr.f32.mxu0 %v573
  %722 = vmatmul.mubr.f32.gmra.mxu0 %v585
  %v723 = vpop.f32.mrf.mxu0
  %v724 = vadd.f32 0.0, %v723
  %v725 = vpop.f32.mrf.mxu0
  %726 = vmatprep.mubr.f32.mxu0 %v574
  %727 = vmatmul.mubr.f32.gmra.mxu0 %v586
  %v728 = vpop.f32.mrf.mxu0
  %v729 = vadd.f32 0.0, %v728
  %v730 = vpop.f32.mrf.mxu0
  %731 = vdwg.mxu0
  %732 = vmatprep.subr.mxu0 0.0
  %733 = vmatpush1.msra.mxu0 %v646
  %734 = vmatprep.subr.mxu0 0.0
  %735 = vmatpush1.msra.mxu0 %v645
  %736 = vmatprep.subr.mxu0 0.0
  %737 = vmatpush1.msra.mxu0 %v644
  %738 = vmatprep.subr.mxu0 0.0
  %739 = vmatpush1.msra.mxu0 %v643
  %740 = vmatprep.subr.mxu0 0.0
  %741 = vmatpush1.msra.mxu0 %v642
  %742 = vmatprep.subr.mxu0 0.0
  %743 = vmatpush1.msra.mxu0 %v641
  %744 = vmatprep.subr.mxu0 0.0
  %745 = vmatpush1.msra.mxu0 %v640
  %746 = vmatprep.subr.mxu0 0.0
  %747 = vmatpush1.msra.mxu0 %v639
  %748 = vmatprep.subr.mxu0 0.0
  %749 = vmatpush1.msra.mxu0 %v638
  %750 = vmatprep.subr.mxu0 0.0
  %751 = vmatpush1.msra.mxu0 %v637
  %752 = vmatprep.subr.mxu0 0.0
  %753 = vmatpush1.msra.mxu0 %v636
  %754 = vmatprep.subr.mxu0 0.0
  %755 = vmatpush1.msra.mxu0 %v635
  %756 = vmatprep.subr.mxu0 0.0
  %757 = vmatpush1.msra.mxu0 %v634
  %758 = vmatprep.subr.mxu0 0.0
  %759 = vmatpush1.msra.mxu0 %v633
  %760 = vmatprep.subr.mxu0 0.0
  %761 = vmatpush1.msra.mxu0 %v632
  %762 = vmatprep.subr.mxu0 0.0
  %763 = vmatpush1.msra.mxu0 %v631
  %764 = vmatprep.subr.mxu0 0.0
  %765 = vmatpush2.msra.mxu0 0.0
  %766 = vmatprep.subr.mxu0 0.0
  %767 = vmatpush2.msra.mxu0 0.0
  %768 = vmatprep.subr.mxu0 0.0
  %769 = vmatpush2.msra.mxu0 0.0
  %770 = vmatprep.subr.mxu0 0.0
  %771 = vmatpush2.msra.mxu0 0.0
  %772 = vmatprep.subr.mxu0 0.0
  %773 = vmatpush2.msra.mxu0 0.0
  %774 = vmatprep.subr.mxu0 0.0
  %775 = vmatpush2.msra.mxu0 0.0
  %776 = vmatprep.subr.mxu0 0.0
  %777 = vmatpush2.msra.mxu0 0.0
  %778 = vmatprep.subr.mxu0 0.0
  %779 = vmatpush2.msra.mxu0 0.0
  %780 = vmatprep.subr.mxu0 0.0
  %781 = vmatpush2.msra.mxu0 0.0
  %782 = vmatprep.subr.mxu0 0.0
  %783 = vmatpush2.msra.mxu0 0.0
  %784 = vmatprep.subr.mxu0 0.0
  %785 = vmatpush2.msra.mxu0 0.0
  %786 = vmatprep.subr.mxu0 0.0
  %787 = vmatpush2.msra.mxu0 0.0
  %788 = vmatprep.subr.mxu0 0.0
  %789 = vmatpush2.msra.mxu0 0.0
  %790 = vmatprep.subr.mxu0 0.0
  %791 = vmatpush2.msra.mxu0 0.0
  %792 = vmatprep.subr.mxu0 0.0
  %793 = vmatpush2.msra.mxu0 0.0
  %794 = vmatprep.subr.mxu0 0.0
  %795 = vmatpush2.msra.mxu0 0.0
  %796 = vmatprep.mubr.f32.mxu0 0.0
  %797 = vmatmul.mubr.f32.gmra.mxu0 %v595
  %v798 = vpop.f32.mrf.mxu0
  %v799 = vadd.f32 %v714, %v798
  %v800 = vpop.f32.mrf.mxu0
  %801 = vmatprep.mubr.f32.mxu0 0.0
  %802 = vmatmul.mubr.f32.gmra.mxu0 %v596
  %v803 = vpop.f32.mrf.mxu0
  %v804 = vadd.f32 %v719, %v803
  %v805 = vpop.f32.mrf.mxu0
  %806 = vmatprep.mubr.f32.mxu0 0.0
  %807 = vmatmul.mubr.f32.gmra.mxu0 %v597
  %v808 = vpop.f32.mrf.mxu0
  %v809 = vadd.f32 %v724, %v808
  %v810 = vpop.f32.mrf.mxu0
  %811 = vmatprep.mubr.f32.mxu0 0.0
  %812 = vmatmul.mubr.f32.gmra.mxu0 %v598
  %v813 = vpop.f32.mrf.mxu0
  %v814 = vadd.f32 %v729, %v813
  %v815 = vpop.f32.mrf.mxu0
  %816 = vdwg.mxu0
  %v817 = vld [vmem:[%s4] sm:$0x3]
  %v818 = vadd.f32 %v799, %v804
  %v819 = vadd.f32 %v818, %v809
  %v820 = vadd.f32 %v819, %v814
  %v821 = vrot.slane %v820, 4
  %v822 = vadd.f32 %v820, %v821
  %v823 = vrot.slane %v822, 2
  %v824 = vadd.f32 %v822, %v823
  %v825 = vrot.slane %v824, 1
  %v826 = vadd.f32 %v824, %v825
  %v827 = vmul.f32 %v799, %v799
  %v828 = vmul.f32 %v804, %v804
  %v829 = vmul.f32 %v809, %v809
  %v830 = vmul.f32 %v814, %v814
  %v831 = vadd.f32 %v827, %v828
  %v832 = vadd.f32 %v831, %v829
  %v833 = vadd.f32 %v832, %v830
  %v834 = vrot.slane %v833, 4
  %v835 = vadd.f32 %v833, %v834
  %v836 = vrot.slane %v835, 2
  %v837 = vadd.f32 %v835, %v836
  %v838 = vrot.slane %v837, 1
  %v839 = vadd.f32 %v837, %v838
  %v840 = vsel %vm391, %v826, %v839
  %841 = vmatprep.subr.mxu0 0.0
  %842 = vmatpush1.msra.mxu0 %v367
  %843 = vmatprep.subr.mxu0 0.0
  %844 = vmatpush1.msra.mxu0 %v366
  %845 = vmatprep.subr.mxu0 0.0
  %846 = vmatpush1.msra.mxu0 %v365
  %847 = vmatprep.subr.mxu0 0.0
  %848 = vmatpush1.msra.mxu0 %v364
  %849 = vmatprep.subr.mxu0 0.0
  %850 = vmatpush1.msra.mxu0 %v363
  %851 = vmatprep.subr.mxu0 0.0
  %852 = vmatpush1.msra.mxu0 %v362
  %853 = vmatprep.subr.mxu0 0.0
  %854 = vmatpush1.msra.mxu0 %v361
  %855 = vmatprep.subr.mxu0 0.0
  %856 = vmatpush1.msra.mxu0 %v360
  %857 = vmatprep.subr.mxu0 0.0
  %858 = vmatpush1.msra.mxu0 %v359
  %859 = vmatprep.subr.mxu0 0.0
  %860 = vmatpush1.msra.mxu0 %v358
  %861 = vmatprep.subr.mxu0 0.0
  %862 = vmatpush1.msra.mxu0 %v357
  %863 = vmatprep.subr.mxu0 0.0
  %864 = vmatpush1.msra.mxu0 %v356
  %865 = vmatprep.subr.mxu0 0.0
  %866 = vmatpush1.msra.mxu0 %v355
  %867 = vmatprep.subr.mxu0 0.0
  %868 = vmatpush1.msra.mxu0 %v354
  %869 = vmatprep.subr.mxu0 0.0
  %870 = vmatpush1.msra.mxu0 %v353
  %871 = vmatprep.subr.mxu0 0.0
  %872 = vmatpush1.msra.mxu0 %v352
  %873 = vmatprep.subr.mxu0 0.0
  %874 = vmatpush2.msra.mxu0 0.0
  %875 = vmatprep.subr.mxu0 0.0
  %876 = vmatpush2.msra.mxu0 0.0
  %877 = vmatprep.subr.mxu0 0.0
  %878 = vmatpush2.msra.mxu0 0.0
  %879 = vmatprep.subr.mxu0 0.0
  %880 = vmatpush2.msra.mxu0 0.0
  %881 = vmatprep.subr.mxu0 0.0
  %882 = vmatpush2.msra.mxu0 0.0
  %883 = vmatprep.subr.mxu0 0.0
  %884 = vmatpush2.msra.mxu0 0.0
  %885 = vmatprep.subr.mxu0 0.0
  %886 = vmatpush2.msra.mxu0 0.0
  %887 = vmatprep.subr.mxu0 0.0
  %888 = vmatpush2.msra.mxu0 0.0
  %889 = vmatprep.subr.mxu0 0.0
  %890 = vmatpush2.msra.mxu0 0.0
  %891 = vmatprep.subr.mxu0 0.0
  %892 = vmatpush2.msra.mxu0 0.0
  %893 = vmatprep.subr.mxu0 0.0
  %894 = vmatpush2.msra.mxu0 0.0
  %895 = vmatprep.subr.mxu0 0.0
  %896 = vmatpush2.msra.mxu0 0.0
  %897 = vmatprep.subr.mxu0 0.0
  %898 = vmatpush2.msra.mxu0 0.0
  %899 = vmatprep.subr.mxu0 0.0
  %900 = vmatpush2.msra.mxu0 0.0
  %901 = vmatprep.subr.mxu0 0.0
  %902 = vmatpush2.msra.mxu0 0.0
  %903 = vmatprep.subr.mxu0 0.0
  %904 = vmatpush2.msra.mxu0 0.0
  %905 = vmatprep.mubr.f32.mxu0 0.0
  %906 = vmatmul.mubr.f32.gmra.mxu0 %v840
  %v907 = vpop.f32.mrf.mxu0
  %v908 = vadd.f32 0.0, %v907
  %v909 = vpop.f32.mrf.mxu0
  %910 = vdwg.mxu0
  %v911 = vmul.f32 %v908, 0.001953125
  %v912 = vmul.f32 %v911, %v911
  %v914 = vrot.slane %v912, 7
  %v916 = vsub.f32 %v911, %v914
  %v917 = vadd.f32 %v916, 1e-05
  %v918 = vrsqrt.pop %v917
  %v920 = vrot.slane %v918, 1
  %v922 = vmul.f32 %v817, %v920
  %v923 = vmul.f32 %v911, %v922
  %v925 = vrot.slane %v923, 7
  %v927 = vsub.f32 %v817, %v925
  %v928 = vsel %vm391, %v922, %v927
  %v930 = vsel %vm481, %v928, 0
  %932 = vmatprep.subr.mxu0 0.0
  %933 = vmatpush1.msra.mxu0 0.0
  %934 = vmatprep.subr.mxu0 0.0
  %935 = vmatpush1.msra.mxu0 0.0
  %936 = vmatprep.subr.mxu0 0.0
  %937 = vmatpush1.msra.mxu0 0.0
  %938 = vmatprep.subr.mxu0 0.0
  %939 = vmatpush1.msra.mxu0 0.0
  %940 = vmatprep.subr.mxu0 0.0
  %941 = vmatpush1.msra.mxu0 0.0
  %942 = vmatprep.subr.mxu0 0.0
  %943 = vmatpush1.msra.mxu0 0.0
  %944 = vmatprep.subr.mxu0 0.0
  %945 = vmatpush1.msra.mxu0 0.0
  %946 = vmatprep.subr.mxu0 0.0
  %947 = vmatpush1.msra.mxu0 0.0
  %948 = vmatprep.subr.mxu0 0.0
  %949 = vmatpush1.msra.mxu0 0.0
  %950 = vmatprep.subr.mxu0 0.0
  %951 = vmatpush1.msra.mxu0 0.0
  %952 = vmatprep.subr.mxu0 0.0
  %953 = vmatpush1.msra.mxu0 0.0
  %954 = vmatprep.subr.mxu0 0.0
  %955 = vmatpush1.msra.mxu0 0.0
  %956 = vmatprep.subr.mxu0 0.0
  %957 = vmatpush1.msra.mxu0 0.0
  %958 = vmatprep.subr.mxu0 0.0
  %959 = vmatpush1.msra.mxu0 0.0
  %960 = vmatprep.subr.mxu0 0.0
  %961 = vmatpush1.msra.mxu0 0.0
  %962 = vmatprep.subr.mxu0 0.0
  %963 = vmatpush1.msra.mxu0 %v368
  %964 = vmatprep.subr.mxu0 0.0
  %965 = vmatpush2.msra.mxu0 0.0
  %966 = vmatprep.subr.mxu0 0.0
  %967 = vmatpush2.msra.mxu0 0.0
  %968 = vmatprep.subr.mxu0 0.0
  %969 = vmatpush2.msra.mxu0 0.0
  %970 = vmatprep.subr.mxu0 0.0
  %971 = vmatpush2.msra.mxu0 0.0
  %972 = vmatprep.subr.mxu0 0.0
  %973 = vmatpush2.msra.mxu0 0.0
  %974 = vmatprep.subr.mxu0 0.0
  %975 = vmatpush2.msra.mxu0 0.0
  %976 = vmatprep.subr.mxu0 0.0
  %977 = vmatpush2.msra.mxu0 0.0
  %978 = vmatprep.subr.mxu0 0.0
  %979 = vmatpush2.msra.mxu0 0.0
  %980 = vmatprep.subr.mxu0 0.0
  %981 = vmatpush2.msra.mxu0 0.0
  %982 = vmatprep.subr.mxu0 0.0
  %983 = vmatpush2.msra.mxu0 0.0
  %984 = vmatprep.subr.mxu0 0.0
  %985 = vmatpush2.msra.mxu0 0.0
  %986 = vmatprep.subr.mxu0 0.0
  %987 = vmatpush2.msra.mxu0 0.0
  %988 = vmatprep.subr.mxu0 0.0
  %989 = vmatpush2.msra.mxu0 0.0
  %990 = vmatprep.subr.mxu0 0.0
  %991 = vmatpush2.msra.mxu0 0.0
  %992 = vmatprep.subr.mxu0 0.0
  %993 = vmatpush2.msra.mxu0 0.0
  %994 = vmatprep.subr.mxu0 0.0
  %995 = vmatpush2.msra.mxu0 0.0
  %996 = vmatprep.mubr.f32.mxu0 0.0
  %997 = vmatmul.mubr.f32.gmra.mxu0 %v930
  %v998 = vpop.f32.mrf.mxu0
  %v999 = vadd.f32 0.0, %v998
  %v1000 = vpop.f32.mrf.mxu0
  %1001 = vdwg.mxu0
  %v1002 = vlaneseq
  %v1003 = vshrl.u32 %v1002, 7
  %v1004 = vsub.s32 0, %v1003
  %v1005 = vrot.slane %v999, %v1004
  %v1006 = vmul.f32 %v799, %v1005
  %v1007 = vmul.f32 %v804, %v1005
  %v1008 = vmul.f32 %v809, %v1005
  %v1009 = vmul.f32 %v814, %v1005
  %v1010 = vlaneseq
  %v1011 = vshrl.u32 %v1010, 7
  %v1012 = vsub.s32 1, %v1011
  %v1013 = vrot.slane %v999, %v1012
  %v1014 = vadd.f32 %v1006, %v1013
  %v1015 = vadd.f32 %v1007, %v1013
  %v1016 = vadd.f32 %v1008, %v1013
  %v1017 = vadd.f32 %v1009, %v1013
  %v1018 = vmax.f32 %v1014, 0.0
  %v1019 = vmax.f32 %v1015, 0.0
  %v1020 = vmax.f32 %v1016, 0.0
  %v1021 = vmax.f32 %v1017, 0.0
  %1022 = vst [vmem:[%s7] sm:$0xff] %v1018
  %1023 = vst [vmem:[%s7 + $0x8] sm:$0xff] %v1019
  %1024 = vst [vmem:[%s7 + $0x10] sm:$0xff] %v1020
  %1025 = vst [vmem:[%s7 + $0x18] sm:$0xff] %v1021
  // Predicated region
  $region30: #{double_conv.1} parent=0 // pred_check
    _
  $region31: #{double_conv.1} parent=0 // pred_check_branch
    %1027 = sbr.rel (0) target = $region33
  $region32: #{double_conv.1} parent=0 // pred_region
    _
  $region33: #{double_conv.1} parent=0 // pred_fallthru
    _
  // Predicated region
  $region34: #{double_conv.1} parent=0 // pred_check
    _
  $region35: #{double_conv.1} parent=0 // pred_check_branch
    %1029 = sbr.rel (0) target = $region37
  $region36: #{double_conv.1} parent=0 // pred_region
    _
  $region37: #{double_conv.1} parent=0 // pred_fallthru
    _

</llo_original>
